<compile_context>
chip_gen: v6e
topology: v6e:2x2x1
jax: 0.10.0
libtpu: 0.0.40
codegen_flags: <defaults>
</compile_context>

<pallas_src>
import functools

import jax
import jax.numpy as jnp
from jax.experimental import pallas as pl
from jax.experimental.pallas import tpu as pltpu

BN_EPS = 1e-5
NEG_SLOPE = 0.0  # float(inTraining == False) with inTraining=True -> ReLU


def _round_up(x, m):
    return ((x + m - 1) // m) * m


def _cdiv(a, b):
    return -(-a // b)


# --------------------------- fused kernel (phase 0 + phase 1) ---------------------------
def _fused_encoder_kernel(x_ref, aux_ref, w1_ref, gamma_ref, beta_ref,
                          w2h_ref, w2a_ref, b2_ref, out_ref,
                          h_scr, pivot_ref, ssum_ref, ssq_ref,
                          *, tm, true_batch, inv_batch, need_mask, mxu_dtype):
    p = pl.program_id(0)            # 0: matmul1 + BN statistics, 1: BN apply + matmul2
    i = pl.program_id(1)            # batch tile index
    row0 = pl.multiple_of(i * tm, 8)

    @pl.when(p == 0)
    def _phase0():
        # NOTE: Linear1 bias intentionally omitted — exact no-op before training-mode BN.
        h = jnp.dot(x_ref[...].astype(mxu_dtype), w1_ref[...].astype(mxu_dtype),
                    preferred_element_type=jnp.float32)            # (tm, hid) f32
        h_scr[pl.ds(row0, tm), :] = h.astype(h_scr.dtype)          # stays in VMEM, never HBM

        @pl.when(i == 0)
        def _init():
            # Per-feature pivot (first tile's mean): makes the single-pass variance
            # numerically robust.  Any value is algebraically exact.
            pivot_ref[...] = jnp.mean(h, axis=0, keepdims=True)
            ssum_ref[...] = jnp.zeros_like(ssum_ref)
            ssq_ref[...] = jnp.zeros_like(ssq_ref)

        hc = h - pivot_ref[...]
        if need_mask:  # zero-padded batch rows must not contribute to the statistics
            rows = i * tm + jax.lax.broadcasted_iota(jnp.int32, (tm, 1), 0)
            hc = jnp.where(rows < true_batch, hc, 0.0)
        ssum_ref[...] += jnp.sum(hc, axis=0, keepdims=True)
        ssq_ref[...] += jnp.sum(hc * hc, axis=0, keepdims=True)

    @pl.when(p == 1)
    def _phase1():
        # Fold BatchNorm (biased batch variance) + affine into per-feature scale/shift.
        m_c = ssum_ref[...] * inv_batch                            # E[h] - pivot
        mean = pivot_ref[...] + m_c
        var = jnp.maximum(ssq_ref[...] * inv_batch - m_c * m_c, 0.0)
        scale = gamma_ref[...] * jax.lax.rsqrt(var + BN_EPS)
        shift = beta_ref[...] - mean * scale

        h = h_scr[pl.ds(row0, tm), :].astype(jnp.float32)
        act = jnp.maximum(h * scale + shift, 0.0)                  # LeakyReLU(0) == ReLU

        # concat([act, aux]) @ W2^T == act @ W2_h + aux @ W2_a  (exact split matmul)
        out = (jnp.dot(act.astype(mxu_dtype), w2h_ref[...].astype(mxu_dtype),
                       preferred_element_type=jnp.float32)
               + jnp.dot(aux_ref[...].astype(mxu_dtype), w2a_ref[...].astype(mxu_dtype),
                         preferred_element_type=jnp.float32)
               + b2_ref[...])
        out_ref[...] = out.astype(out_ref.dtype)


def _vmem_estimate(b_pad, tm, in_dim, aux_dim, hid, out_dim, h_bytes):
    """Rough VMEM footprint (lane-padded to 128, sublane to 8) for the fused kernel."""
    lane = lambda n: _round_up(max(n, 1), 128)
    sub = lambda n: _round_up(max(n, 1), 8)
    total = b_pad * lane(hid) * h_bytes                                    # resident h scratch
    total += 3 * sub(1) * lane(hid) * 4                                    # pivot / ssum / ssq
    total += 2 * tm * (lane(in_dim) + lane(aux_dim) + lane(out_dim)) * 4   # double-buffered I/O
    total += 2 * (sub(in_dim) * lane(hid) + sub(hid) * lane(out_dim)       # resident params
                  + sub(aux_dim) * lane(out_dim)
                  + 3 * sub(1) * lane(hid) + sub(1) * lane(out_dim)) * 4
    return total


def encoder_forward(x, aux_feat, params, *, mxu_dtype=jnp.bfloat16, max_batch_tile=2048):
    B, in_dim = x.shape
    aux_dim = aux_feat.shape[1]
    hid = params["w1"].shape[1]
    out_dim = params["w2h"].shape[1]
    f32 = jnp.float32

    # ---- batch tiling: pad B up to nb * tm (tm multiple of 8, capped) ----
    max_tile = max(8, _round_up(max_batch_tile, 8))
    nb = _cdiv(B, max_tile)
    tm = _round_up(_cdiv(B, nb), 8)
    b_pad = nb * tm
    if b_pad != B:  # zero rows: contribute 0 to masked BN stats, sliced off the output
        x = jnp.pad(x, ((0, b_pad - B), (0, 0)))
        aux_feat = jnp.pad(aux_feat, ((0, b_pad - B), (0, 0)))

    h_dtype = mxu_dtype  # bf16 halves the resident-h VMEM footprint on the production path
    est = _vmem_estimate(b_pad, tm, in_dim, aux_dim, hid, out_dim, jnp.dtype(h_dtype).itemsize)
    # Keep the resident-h design well inside the smallest physical VMEM (v7x: 64 MiB).
    assert est <= 48 * 2**20, (
        f"resident-h VMEM footprint {est / 2**20:.1f} MiB too large for the fused kernel; "
        "reduce the batch or add the streaming two-pass fallback")
    vmem_limit = int(min(56 * 2**20, max(24 * 2**20, est + 8 * 2**20)))

    kernel = functools.partial(
        _fused_encoder_kernel, tm=tm, true_batch=B, inv_batch=1.0 / B,
        need_mask=(b_pad != B), mxu_dtype=mxu_dtype)

    out = pl.pallas_call(
        kernel,
        out_shape=jax.ShapeDtypeStruct((b_pad, out_dim), f32),
        grid_spec=pltpu.PrefetchScalarGridSpec(
            num_scalar_prefetch=0,
            grid=(2, nb),  # (phase, batch tile); phase-major iteration order
            in_specs=[
                # x: streamed in phase 0, parked at block 0 in phase 1
                pl.BlockSpec((tm, in_dim), lambda p, i: (i * (1 - p), 0)),
                # aux: parked at block 0 in phase 0, streamed in phase 1
                pl.BlockSpec((tm, aux_dim), lambda p, i: (i * p, 0)),
                pl.BlockSpec((in_dim, hid), lambda p, i: (0, 0)),
                pl.BlockSpec((1, hid), lambda p, i: (0, 0)),      # gamma
                pl.BlockSpec((1, hid), lambda p, i: (0, 0)),      # beta
                pl.BlockSpec((hid, out_dim), lambda p, i: (0, 0)),
                pl.BlockSpec((aux_dim, out_dim), lambda p, i: (0, 0)),
                pl.BlockSpec((1, out_dim), lambda p, i: (0, 0)),  # b2
            ],
            # output only advances (and is only written) during phase 1
            out_specs=pl.BlockSpec((tm, out_dim), lambda p, i: (i * p, 0)),
            scratch_shapes=[
                pltpu.VMEM((b_pad, hid), h_dtype),   # resident h (never touches HBM)
                pltpu.VMEM((1, hid), f32),           # pivot
                pltpu.VMEM((1, hid), f32),           # sum(h - pivot)
                pltpu.VMEM((1, hid), f32),           # sum((h - pivot)^2)
            ]),
        compiler_params=pltpu.CompilerParams(
            dimension_semantics=("arbitrary", "arbitrary"),
            vmem_limit_bytes=vmem_limit),
    )(x, aux_feat, params["w1"], params["gamma"], params["beta"],
      params["w2h"], params["w2a"], params["b2"])

    return out[:B]


# ------------------------------- params / pure-JAX reference -------------------------------
def init_params(key, in_dim, hidden1, out_dim, aux_dim):
    k1, k2, k3, k4 = jax.random.split(key, 4)
    # Linear1: torch weight is (hidden1, in_dim); store transposed (in_dim, hidden1)
    w1 = jax.random.normal(k1, (in_dim, hidden1), jnp.float32) * 0.1
    b1 = jax.random.normal(k2, (1, hidden1), jnp.float32) * 0.1   # used only by the reference
    gamma = jnp.ones((1, hidden1), jnp.float32)                    # BN affine defaults
    beta = jnp.zeros((1, hidden1), jnp.float32)
    # Linear2: torch weight is (out_dim, hidden1 + aux_dim); split + transpose
    w2 = jax.random.normal(k3, (hidden1 + aux_dim, out_dim), jnp.float32) * 0.1
    b2 = jax.random.normal(k4, (1, out_dim), jnp.float32) * 0.1
    return {"w1": w1, "b1": b1, "gamma": gamma, "beta": beta,
            "w2h": w2[:hidden1, :], "w2a": w2[hidden1:, :], "b2": b2}


def reference_forward(x, aux_feat, params):
    """Pure-JAX f32 reference matching PyTorch semantics (includes b1, two-pass variance)."""
    h = x @ params["w1"] + params["b1"]
    mean = jnp.mean(h, axis=0, keepdims=True)
    var = jnp.mean((h - mean) ** 2, axis=0, keepdims=True)          # biased, like training BN
    h = (h - mean) / jnp.sqrt(var + BN_EPS)
    h = h * params["gamma"] + params["beta"]
    h = jnp.where(h > 0, h, NEG_SLOPE * h)
    cat = jnp.concatenate([h, aux_feat], axis=1)
    w2 = jnp.concatenate([params["w2h"], params["w2a"]], axis=0)
    return cat @ w2 + params["b2"]


if __name__ == "__main__":
    # small shapes: batch=8, encoder_inDim=16, encoder_numHidden1=32,
    #               encoder_outDim=16, encoder_auxFeatDim=8
    B, IN_DIM, HID, OUT_DIM, AUX_DIM = 8, 16, 32, 16, 8

    key = jax.random.PRNGKey(0)
    kx, ka, kp = jax.random.split(key, 3)
    x = jax.random.normal(kx, (B, IN_DIM), jnp.float32)
    aux_feat = jax.random.normal(ka, (B, AUX_DIM), jnp.float32)
    params = init_params(kp, IN_DIM, HID, OUT_DIM, AUX_DIM)

    ref = reference_forward(x, aux_feat, params)

    # Exactness check (f32 MXU path): verifies fused phases, pivot-shifted variance and the
    # dropped pre-BN bias are numerically faithful.
    out_f32 = jax.block_until_ready(
        encoder_forward(x, aux_feat, params, mxu_dtype=jnp.float32))
    assert out_f32.shape == (B, OUT_DIM)
    assert jnp.allclose(out_f32, ref, atol=1e-4, rtol=1e-4), "f32 kernel mismatch vs reference"

    # Production path: bf16 MXU operands / bf16 resident h, f32 accumulation and BN math.
    out_bf16 = jax.block_until_ready(
        encoder_forward(x, aux_feat, params, mxu_dtype=jnp.bfloat16))
    assert out_bf16.shape == (B, OUT_DIM)
    assert jnp.allclose(out_bf16, ref, atol=1e-1, rtol=1e-1), "bf16 kernel drifted from reference"

    # Exercise the batch-padding + masked-statistics path (B not a multiple of 8).
    B2 = 13
    x2 = jax.random.normal(jax.random.PRNGKey(1), (B2, IN_DIM), jnp.float32)
    a2 = jax.random.normal(jax.random.PRNGKey(2), (B2, AUX_DIM), jnp.float32)
    ref2 = reference_forward(x2, a2, params)
    out2 = jax.block_until_ready(
        encoder_forward(x2, a2, params, mxu_dtype=jnp.float32))
    assert out2.shape == (B2, OUT_DIM)
    assert jnp.allclose(out2, ref2, atol=1e-4, rtol=1e-4), "padded-batch kernel mismatch"

    print("KERNEL_OK")
</pallas_src>

<mosaic_0001>
module attributes {stable_mosaic.version = 11 : i64} {
  func.func @_fused_encoder_kernel(%arg0: i32, %arg1: i32, %arg2: memref<8x16xf32, #tpu.memory_space<vmem>>, %arg3: memref<8x8xf32, #tpu.memory_space<vmem>>, %arg4: memref<16x32xf32, #tpu.memory_space<vmem>>, %arg5: memref<1x32xf32, #tpu.memory_space<vmem>>, %arg6: memref<1x32xf32, #tpu.memory_space<vmem>>, %arg7: memref<32x16xf32, #tpu.memory_space<vmem>>, %arg8: memref<8x16xf32, #tpu.memory_space<vmem>>, %arg9: memref<1x16xf32, #tpu.memory_space<vmem>>, %arg10: memref<8x16xf32, #tpu.memory_space<vmem>>, %arg11: memref<8x32xf32, #tpu.memory_space<vmem>>, %arg12: memref<1x32xf32, #tpu.memory_space<vmem>>, %arg13: memref<1x32xf32, #tpu.memory_space<vmem>>, %arg14: memref<1x32xf32, #tpu.memory_space<vmem>>) attributes {dimension_semantics = [#tpu.dimension_semantics<arbitrary>, #tpu.dimension_semantics<arbitrary>], iteration_bounds = array<i64: 2, 1>, scalar_prefetch = 0 : i64, scratch_operands = 4 : i64, tpu.core_type = #tpu.core_type<tc>, window_params = [{transform_indices = @transform_0, window_bounds = array<i64: 8, 16>}, {transform_indices = @transform_1, window_bounds = array<i64: 8, 8>}, {pipeline_mode = #tpu.pipeline_mode<synchronous>, transform_indices = @transform_2, window_bounds = array<i64: 16, 32>}, {pipeline_mode = #tpu.pipeline_mode<synchronous>, transform_indices = @transform_3, window_bounds = array<i64: 1, 32>}, {pipeline_mode = #tpu.pipeline_mode<synchronous>, transform_indices = @transform_4, window_bounds = array<i64: 1, 32>}, {pipeline_mode = #tpu.pipeline_mode<synchronous>, transform_indices = @transform_5, window_bounds = array<i64: 32, 16>}, {pipeline_mode = #tpu.pipeline_mode<synchronous>, transform_indices = @transform_6, window_bounds = array<i64: 8, 16>}, {pipeline_mode = #tpu.pipeline_mode<synchronous>, transform_indices = @transform_7, window_bounds = array<i64: 1, 16>}, {transform_indices = @transform_8, window_bounds = array<i64: 8, 16>}]} {
    %c8_i32 = arith.constant 8 : i32
    %0 = arith.muli %arg1, %c8_i32 : i32
    %1 = tpu.assume_multiple %0, 8 : i32
    %c0_i32 = arith.constant 0 : i32
    %2 = arith.cmpi eq, %arg0, %c0_i32 : i32
    %3 = arith.extui %2 : i1 to i32
    %c0_i32_0 = arith.constant 0 : i32
    %4 = arith.cmpi ne, %3, %c0_i32_0 : i32
    scf.if %4 {
      %c0 = arith.constant 0 : index
      %c0_2 = arith.constant 0 : index
      %8 = vector.load %arg2[%c0, %c0_2] : memref<8x16xf32, #tpu.memory_space<vmem>>, vector<8x16xf32>
      %c0_3 = arith.constant 0 : index
      %c0_4 = arith.constant 0 : index
      %9 = vector.load %arg4[%c0_3, %c0_4] : memref<16x32xf32, #tpu.memory_space<vmem>>, vector<16x32xf32>
      %cst = arith.constant dense<0.000000e+00> : vector<8x32xf32>
      %10 = tpu.matmul %8, %9, %cst {dimension_numbers = #tpu.dot_dimension_numbers<[1], [0], [0], [1], [0, 0, 1, 1], [], []>} : vector<8x16xf32>, vector<16x32xf32>, vector<8x32xf32> -> vector<8x32xf32>
      %11 = arith.index_cast %1 : i32 to index
      %c0_5 = arith.constant 0 : index
      %12 = vector.load %arg11[%11, %c0_5] : memref<8x32xf32, #tpu.memory_space<vmem>>, vector<8x32xf32>
      tpu.vector_store %arg11[%11, %c0_5], %10 {strides = array<i32>} : memref<8x32xf32, #tpu.memory_space<vmem>>, vector<8x32xf32>,
      %c0_i32_6 = arith.constant 0 : i32
      %13 = arith.cmpi eq, %arg1, %c0_i32_6 : i32
      %14 = arith.extui %13 : i1 to i32
      %c0_i32_7 = arith.constant 0 : i32
      %15 = arith.cmpi ne, %14, %c0_i32_7 : i32
      scf.if %15 {
        %cst_20 = arith.constant dense<0.000000e+00> : vector<32xf32>
        %30 = vector.multi_reduction <add>, %10, %cst_20 [0] : vector<8x32xf32> to vector<32xf32>
        %31 = vector.shape_cast %30 : vector<32xf32> to vector<1x32xf32>
        %cst_21 = arith.constant 8.000000e+00 : f32
        %32 = vector.broadcast %cst_21 : f32 to vector<1x32xf32>
        %33 = arith.divf %31, %32 : vector<1x32xf32>
        %c0_22 = arith.constant 0 : index
        %c0_23 = arith.constant 0 : index
        %34 = vector.load %arg12[%c0_22, %c0_23] : memref<1x32xf32, #tpu.memory_space<vmem>>, vector<1x32xf32>
        tpu.vector_store %arg12[%c0_22, %c0_23], %33 {strides = array<i32>} : memref<1x32xf32, #tpu.memory_space<vmem>>, vector<1x32xf32>,
        %cst_24 = arith.constant 0.000000e+00 : f32
        %35 = vector.broadcast %cst_24 : f32 to vector<1x32xf32>
        %c0_25 = arith.constant 0 : index
        %c0_26 = arith.constant 0 : index
        %36 = vector.load %arg13[%c0_25, %c0_26] : memref<1x32xf32, #tpu.memory_space<vmem>>, vector<1x32xf32>
        tpu.vector_store %arg13[%c0_25, %c0_26], %35 {strides = array<i32>} : memref<1x32xf32, #tpu.memory_space<vmem>>, vector<1x32xf32>,
        %cst_27 = arith.constant 0.000000e+00 : f32
        %37 = vector.broadcast %cst_27 : f32 to vector<1x32xf32>
        %c0_28 = arith.constant 0 : index
        %c0_29 = arith.constant 0 : index
        %38 = vector.load %arg14[%c0_28, %c0_29] : memref<1x32xf32, #tpu.memory_space<vmem>>, vector<1x32xf32>
        tpu.vector_store %arg14[%c0_28, %c0_29], %37 {strides = array<i32>} : memref<1x32xf32, #tpu.memory_space<vmem>>, vector<1x32xf32>,
      } else {
      }
      %c0_8 = arith.constant 0 : index
      %c0_9 = arith.constant 0 : index
      %16 = vector.load %arg12[%c0_8, %c0_9] : memref<1x32xf32, #tpu.memory_space<vmem>>, vector<1x32xf32>
      %17 = vector.broadcast %16 : vector<1x32xf32> to vector<8x32xf32>
      %18 = arith.subf %10, %17 : vector<8x32xf32>
      %c0_10 = arith.constant 0 : index
      %c0_11 = arith.constant 0 : index
      %19 = vector.load %arg13[%c0_10, %c0_11] : memref<1x32xf32, #tpu.memory_space<vmem>>, vector<1x32xf32>
      %cst_12 = arith.constant dense<0.000000e+00> : vector<32xf32>
      %20 = vector.multi_reduction <add>, %18, %cst_12 [0] : vector<8x32xf32> to vector<32xf32>
      %21 = vector.shape_cast %20 : vector<32xf32> to vector<1x32xf32>
      %22 = arith.addf %19, %21 : vector<1x32xf32>
      %c0_13 = arith.constant 0 : index
      %c0_14 = arith.constant 0 : index
      %23 = vector.load %arg13[%c0_13, %c0_14] : memref<1x32xf32, #tpu.memory_space<vmem>>, vector<1x32xf32>
      tpu.vector_store %arg13[%c0_13, %c0_14], %22 {strides = array<i32>} : memref<1x32xf32, #tpu.memory_space<vmem>>, vector<1x32xf32>,
      %c0_15 = arith.constant 0 : index
      %c0_16 = arith.constant 0 : index
      %24 = vector.load %arg14[%c0_15, %c0_16] : memref<1x32xf32, #tpu.memory_space<vmem>>, vector<1x32xf32>
      %25 = arith.mulf %18, %18 : vector<8x32xf32>
      %cst_17 = arith.constant dense<0.000000e+00> : vector<32xf32>
      %26 = vector.multi_reduction <add>, %25, %cst_17 [0] : vector<8x32xf32> to vector<32xf32>
      %27 = vector.shape_cast %26 : vector<32xf32> to vector<1x32xf32>
      %28 = arith.addf %24, %27 : vector<1x32xf32>
      %c0_18 = arith.constant 0 : index
      %c0_19 = arith.constant 0 : index
      %29 = vector.load %arg14[%c0_18, %c0_19] : memref<1x32xf32, #tpu.memory_space<vmem>>, vector<1x32xf32>
      tpu.vector_store %arg14[%c0_18, %c0_19], %28 {strides = array<i32>} : memref<1x32xf32, #tpu.memory_space<vmem>>, vector<1x32xf32>,
    } else {
    }
    %c1_i32 = arith.constant 1 : i32
    %5 = arith.cmpi eq, %arg0, %c1_i32 : i32
    %6 = arith.extui %5 : i1 to i32
    %c0_i32_1 = arith.constant 0 : i32
    %7 = arith.cmpi ne, %6, %c0_i32_1 : i32
    scf.if %7 {
      %c0 = arith.constant 0 : index
      %c0_2 = arith.constant 0 : index
      %8 = vector.load %arg13[%c0, %c0_2] : memref<1x32xf32, #tpu.memory_space<vmem>>, vector<1x32xf32>
      %cst = arith.constant 1.250000e-01 : f32
      %9 = vector.broadcast %cst : f32 to vector<1x32xf32>
      %10 = arith.mulf %8, %9 : vector<1x32xf32>
      %c0_3 = arith.constant 0 : index
      %c0_4 = arith.constant 0 : index
      %11 = vector.load %arg12[%c0_3, %c0_4] : memref<1x32xf32, #tpu.memory_space<vmem>>, vector<1x32xf32>
      %12 = arith.addf %11, %10 : vector<1x32xf32>
      %c0_5 = arith.constant 0 : index
      %c0_6 = arith.constant 0 : index
      %13 = vector.load %arg14[%c0_5, %c0_6] : memref<1x32xf32, #tpu.memory_space<vmem>>, vector<1x32xf32>
      %cst_7 = arith.constant 1.250000e-01 : f32
      %14 = vector.broadcast %cst_7 : f32 to vector<1x32xf32>
      %15 = arith.mulf %13, %14 : vector<1x32xf32>
      %16 = arith.mulf %10, %10 : vector<1x32xf32>
      %17 = arith.subf %15, %16 : vector<1x32xf32>
      %cst_8 = arith.constant 0.000000e+00 : f32
      %18 = vector.broadcast %cst_8 : f32 to vector<1x32xf32>
      %19 = arith.maximumf %17, %18 : vector<1x32xf32>
      %c0_9 = arith.constant 0 : index
      %c0_10 = arith.constant 0 : index
      %20 = vector.load %arg5[%c0_9, %c0_10] : memref<1x32xf32, #tpu.memory_space<vmem>>, vector<1x32xf32>
      %cst_11 = arith.constant 9.99999974E-6 : f32
      %21 = vector.broadcast %cst_11 : f32 to vector<1x32xf32>
      %22 = arith.addf %19, %21 : vector<1x32xf32>
      %23 = math.rsqrt %22 : vector<1x32xf32>
      %24 = arith.mulf %20, %23 : vector<1x32xf32>
      %c0_12 = arith.constant 0 : index
      %c0_13 = arith.constant 0 : index
      %25 = vector.load %arg6[%c0_12, %c0_13] : memref<1x32xf32, #tpu.memory_space<vmem>>, vector<1x32xf32>
      %26 = arith.mulf %12, %24 : vector<1x32xf32>
      %27 = arith.subf %25, %26 : vector<1x32xf32>
      %28 = arith.index_cast %1 : i32 to index
      %c0_14 = arith.constant 0 : index
      %29 = vector.load %arg11[%28, %c0_14] : memref<8x32xf32, #tpu.memory_space<vmem>>, vector<8x32xf32>
      %30 = vector.broadcast %24 : vector<1x32xf32> to vector<8x32xf32>
      %31 = arith.mulf %29, %30 : vector<8x32xf32>
      %32 = vector.broadcast %27 : vector<1x32xf32> to vector<8x32xf32>
      %33 = arith.addf %31, %32 : vector<8x32xf32>
      %cst_15 = arith.constant 0.000000e+00 : f32
      %34 = vector.broadcast %cst_15 : f32 to vector<8x32xf32>
      %35 = arith.maximumf %33, %34 : vector<8x32xf32>
      %c0_16 = arith.constant 0 : index
      %c0_17 = arith.constant 0 : index
      %36 = vector.load %arg7[%c0_16, %c0_17] : memref<32x16xf32, #tpu.memory_space<vmem>>, vector<32x16xf32>
      %cst_18 = arith.constant dense<0.000000e+00> : vector<8x16xf32>
      %37 = tpu.matmul %35, %36, %cst_18 {dimension_numbers = #tpu.dot_dimension_numbers<[1], [0], [0], [1], [0, 0, 1, 1], [], []>} : vector<8x32xf32>, vector<32x16xf32>, vector<8x16xf32> -> vector<8x16xf32>
      %c0_19 = arith.constant 0 : index
      %c0_20 = arith.constant 0 : index
      %38 = vector.load %arg3[%c0_19, %c0_20] : memref<8x8xf32, #tpu.memory_space<vmem>>, vector<8x8xf32>
      %c0_21 = arith.constant 0 : index
      %c0_22 = arith.constant 0 : index
      %39 = vector.load %arg8[%c0_21, %c0_22] : memref<8x16xf32, #tpu.memory_space<vmem>>, vector<8x16xf32>
      %cst_23 = arith.constant dense<0.000000e+00> : vector<8x16xf32>
      %40 = tpu.matmul %38, %39, %cst_23 {dimension_numbers = #tpu.dot_dimension_numbers<[1], [0], [0], [1], [0, 0, 1, 1], [], []>} : vector<8x8xf32>, vector<8x16xf32>, vector<8x16xf32> -> vector<8x16xf32>
      %41 = arith.addf %37, %40 : vector<8x16xf32>
      %c0_24 = arith.constant 0 : index
      %c0_25 = arith.constant 0 : index
      %42 = vector.load %arg9[%c0_24, %c0_25] : memref<1x16xf32, #tpu.memory_space<vmem>>, vector<1x16xf32>
      %43 = vector.broadcast %42 : vector<1x16xf32> to vector<8x16xf32>
      %44 = arith.addf %41, %43 : vector<8x16xf32>
      %c0_26 = arith.constant 0 : index
      %c0_27 = arith.constant 0 : index
      %45 = vector.load %arg10[%c0_26, %c0_27] : memref<8x16xf32, #tpu.memory_space<vmem>>, vector<8x16xf32>
      tpu.vector_store %arg10[%c0_26, %c0_27], %44 {strides = array<i32>} : memref<8x16xf32, #tpu.memory_space<vmem>>, vector<8x16xf32>,
    } else {
    }
    return
  }
  func.func @transform_0(%arg0: i32, %arg1: i32) -> (i32, i32) {
    %c1_i32 = arith.constant 1 : i32
    %0 = arith.subi %c1_i32, %arg0 : i32
    %1 = arith.muli %arg1, %0 : i32
    %c0_i32 = arith.constant 0 : i32
    %c0_i32_0 = arith.constant 0 : i32
    return %1, %c0_i32 : i32, i32
  }
  func.func @transform_1(%arg0: i32, %arg1: i32) -> (i32, i32) {
    %0 = arith.muli %arg1, %arg0 : i32
    %c0_i32 = arith.constant 0 : i32
    %c0_i32_0 = arith.constant 0 : i32
    return %0, %c0_i32 : i32, i32
  }
  func.func @transform_2(%arg0: i32, %arg1: i32) -> (i32, i32) {
    %c0_i32 = arith.constant 0 : i32
    %c0_i32_0 = arith.constant 0 : i32
    %c0_i32_1 = arith.constant 0 : i32
    return %c0_i32, %c0_i32_0 : i32, i32
  }
  func.func @transform_3(%arg0: i32, %arg1: i32) -> (i32, i32) {
    %c0_i32 = arith.constant 0 : i32
    %c0_i32_0 = arith.constant 0 : i32
    %c0_i32_1 = arith.constant 0 : i32
    return %c0_i32, %c0_i32_0 : i32, i32
  }
  func.func @transform_4(%arg0: i32, %arg1: i32) -> (i32, i32) {
    %c0_i32 = arith.constant 0 : i32
    %c0_i32_0 = arith.constant 0 : i32
    %c0_i32_1 = arith.constant 0 : i32
    return %c0_i32, %c0_i32_0 : i32, i32
  }
  func.func @transform_5(%arg0: i32, %arg1: i32) -> (i32, i32) {
    %c0_i32 = arith.constant 0 : i32
    %c0_i32_0 = arith.constant 0 : i32
    %c0_i32_1 = arith.constant 0 : i32
    return %c0_i32, %c0_i32_0 : i32, i32
  }
  func.func @transform_6(%arg0: i32, %arg1: i32) -> (i32, i32) {
    %c0_i32 = arith.constant 0 : i32
    %c0_i32_0 = arith.constant 0 : i32
    %c0_i32_1 = arith.constant 0 : i32
    return %c0_i32, %c0_i32_0 : i32, i32
  }
  func.func @transform_7(%arg0: i32, %arg1: i32) -> (i32, i32) {
    %c0_i32 = arith.constant 0 : i32
    %c0_i32_0 = arith.constant 0 : i32
    %c0_i32_1 = arith.constant 0 : i32
    return %c0_i32, %c0_i32_0 : i32, i32
  }
  func.func @transform_8(%arg0: i32, %arg1: i32) -> (i32, i32) {
    %0 = arith.muli %arg1, %arg0 : i32
    %c0_i32 = arith.constant 0 : i32
    %c0_i32_0 = arith.constant 0 : i32
    return %0, %c0_i32 : i32, i32
  }
}

</mosaic_0001>

<llo_original>
// kernel: tpu_custom_call.1
$region0: #{tpu_custom_call.1}
  #allocation0 [shape = 'u32[]', space=smem, size = 0x4, offset = 0x4, fixed_abs, tag = 'smem constant byte address 0x4 - core index']
  #allocation1 [shape = 'u32[144,128]{1,0:T(1,128)}', space=vmem, size = 0x12000, scoped, tag = 'internal scratch']
  #allocation2 [shape = 'f32[8,32]{1,0:T(8,128)}', space=vmem, size = 0x1000, scoped, tag = 'scratch operand']
  #allocation3 [shape = 'f32[1,32]{1,0:T(1,128)}', space=vmem, size = 0x200, scoped, tag = 'scratch operand']
  #allocation4 [shape = 'f32[1,32]{1,0:T(1,128)}', space=vmem, size = 0x200, scoped, tag = 'scratch operand']
  #allocation5 [shape = 'f32[1,32]{1,0:T(1,128)}', space=vmem, size = 0x200, scoped, tag = 'scratch operand']
  %s0 = inlined_call_operand.vmem [shape: f32[8,16], index: 0, kind: input, shape index: {}]
  %s1 = inlined_call_operand.vmem [shape: f32[8,8], index: 1, kind: input, shape index: {}]
  %s2 = inlined_call_operand.vmem [shape: f32[16,32], index: 2, kind: input, shape index: {}]
  %s3 = inlined_call_operand.vmem [shape: f32[1,32], index: 3, kind: input, shape index: {}]
  %s4 = inlined_call_operand.vmem [shape: f32[1,32], index: 4, kind: input, shape index: {}]
  %s5 = inlined_call_operand.vmem [shape: f32[32,16], index: 5, kind: input, shape index: {}]
  %s6 = inlined_call_operand.vmem [shape: f32[8,16], index: 6, kind: input, shape index: {}]
  %s7 = inlined_call_operand.vmem [shape: f32[1,16], index: 7, kind: input, shape index: {}]
  %s8 = inlined_call_operand.hbm [shape: f32[8,16], index: 8, kind: output, shape index: {}]
  %s9 = sld [smem:[#allocation0]]
  $region77: #{tpu_custom_call.1} parent=0
    _
  %s11 = ssub.s32 1, %s9
  %s12 = scalar_select 0, %s11, %s9
  $region1: #{tpu_custom_call.1} parent=0
    #allocation6 [shape = 'u8[8192]{0}', space=vmem, size = 0x2000, scoped, tag = 'output window, operand 0']
    #allocation7 [shape = 's32[2]{0}', space=sflag, size = 0x8, scoped, tag = 'scoped memory for tpu_custom_call.1']
    %13 = vsyncpa [#allocation7], 0
    %s14 = scalar_lea.sflag [#allocation7], 1
    %15 = vsyncpa %s14, 0
    loop: start=0, step=1, limit=4
    $region2: #{tpu_custom_call.1} parent=1 // loop_pre_header
      _
    $region3: #{tpu_custom_call.1} parent=1 // loop_header
      %s17 = sphi 0, %s21
      %p18 = scmp.ge.s32.totalorder %s17, 4
      %s24 = sphi 0, %s36
      %s25 = sphi 0, %s32
      %s26 = sphi 0, %s24
      %s27 = sphi 0, %s25
      %s28 = sphi 0, %s26
      %s29 = sphi 0, %s27
      %s43 = sphi 0, %s45
      %s46 = sphi 0, %s43
      %s47 = sphi 0, %s46
      %s63 = sphi 0, %s47
      %s71 = sphi 0, %s73
      %s74 = sphi 0, %s71
      %s75 = sphi 0, %s74
      %s91 = sphi 0, %s75
      %s95 = sphi 0, %s95
      %s97 = sphi 0, %s95
      %s98 = sphi 0, %s97
      %s112 = sphi 0, %s98
      %s116 = sphi 0, %s116
      %s118 = sphi 0, %s116
      %s119 = sphi 0, %s118
      %s133 = sphi 0, %s119
      %s137 = sphi 0, %s137
      %s139 = sphi 0, %s137
      %s140 = sphi 0, %s139
      %s154 = sphi 0, %s140
      %s158 = sphi 0, %s158
      %s160 = sphi 0, %s158
      %s161 = sphi 0, %s160
      %s175 = sphi 0, %s161
      %s179 = sphi 0, %s179
      %s181 = sphi 0, %s179
      %s182 = sphi 0, %s181
      %s196 = sphi 0, %s182
      %s200 = sphi 0, %s200
      %s202 = sphi 0, %s200
      %s203 = sphi 0, %s202
      %s217 = sphi 0, %s203
      %s225 = sphi 0, %s227
      %s228 = sphi 0, %s225
      %s229 = sphi 0, %s228
      %s245 = sphi 0, %s229
    $region4: #{tpu_custom_call.1} parent=1 // loop_header_branch
      %20 = sbr.rel (%p18) target = $region8
    $region5: #{tpu_custom_call.1} parent=1 // loop_body
      %s22 = ssub.s32 %s17, 1
      %s23 = ssub.s32 %s17, 2
      %s30 = sadd.s32 1, %s25
      %p31 = scmp.ge.s32.totalorder %s30, 1
      %s32 = scalar_select %p31, 0, %s30
      %s33 = sadd.s32 1, %s24
      %s34 = scalar_select %p31, %s33, %s24
      %p35 = scmp.ge.s32.totalorder %s34, 2
      %s36 = scalar_select %p35, 0, %s34
      %s37 = ssub.s32 1, %s24
      %s38 = smul.u32 %s25, %s37
      %s39 = ssub.s32 1, %s36
      %s40 = smul.u32 %s32, %s39
      %s41 = ssub.s32 %s38, %s40
      %p42 = scmp.eq.s32.totalorder %s41, 0
      %s44 = sadd.s32 %s43, 1
      %s45 = scalar_select %p42, %s43, %s44
      %p48 = pneg %p42
      %p49 = scmp.eq.s32.totalorder %s17, 1
      %p50 = por %p48, %p49
      %p51 = scmp.ne.s32.totalorder %s43, %s46
      %p52 = scmp.eq.s32.totalorder %s17, 0
      %p53 = por %p51, %p52
      %p54 = scmp.ne.s32.totalorder %s43, %s46
      %p55 = scmp.eq.s32.totalorder %s22, 1
      %p56 = por %p54, %p55
      %p57 = scmp.ne.s32.totalorder %s46, %s47
      %p58 = scmp.eq.s32.totalorder %s22, 0
      %p59 = por %p57, %p58
      %p60 = scmp.ne.s32.totalorder %s46, %s47
      %p61 = scmp.eq.s32.totalorder %s23, 1
      %p62 = por %p60, %p61
      %p64 = scmp.ne.s32.totalorder %s47, %s63
      %p65 = scmp.eq.s32.totalorder %s23, 0
      %p66 = por %p64, %p65
      %s67 = smul.u32 %s25, %s24
      %s68 = smul.u32 %s32, %s36
      %s69 = ssub.s32 %s67, %s68
      %p70 = scmp.eq.s32.totalorder %s69, 0
      %s72 = sadd.s32 %s71, 1
      %s73 = scalar_select %p70, %s71, %s72
      %p76 = pneg %p70
      %p77 = scmp.eq.s32.totalorder %s17, 1
      %p78 = por %p76, %p77
      %p79 = scmp.ne.s32.totalorder %s71, %s74
      %p80 = scmp.eq.s32.totalorder %s17, 0
      %p81 = por %p79, %p80
      %p82 = scmp.ne.s32.totalorder %s71, %s74
      %p83 = scmp.eq.s32.totalorder %s22, 1
      %p84 = por %p82, %p83
      %p85 = scmp.ne.s32.totalorder %s74, %s75
      %p86 = scmp.eq.s32.totalorder %s22, 0
      %p87 = por %p85, %p86
      %p88 = scmp.ne.s32.totalorder %s74, %s75
      %p89 = scmp.eq.s32.totalorder %s23, 1
      %p90 = por %p88, %p89
      %p92 = scmp.ne.s32.totalorder %s75, %s91
      %p93 = scmp.eq.s32.totalorder %s23, 0
      %p94 = por %p92, %p93
      %s96 = sadd.s32 %s95, 1
      %p99 = scmp.eq.s32.totalorder %s17, 1
      %p100 = scmp.ne.s32.totalorder %s95, %s97
      %p101 = scmp.eq.s32.totalorder %s17, 0
      %p102 = por %p100, %p101
      %p103 = scmp.ne.s32.totalorder %s95, %s97
      %p104 = scmp.eq.s32.totalorder %s22, 1
      %p105 = por %p103, %p104
      %p106 = scmp.ne.s32.totalorder %s97, %s98
      %p107 = scmp.eq.s32.totalorder %s22, 0
      %p108 = por %p106, %p107
      %p109 = scmp.ne.s32.totalorder %s97, %s98
      %p110 = scmp.eq.s32.totalorder %s23, 1
      %p111 = por %p109, %p110
      %p113 = scmp.ne.s32.totalorder %s98, %s112
      %p114 = scmp.eq.s32.totalorder %s23, 0
      %p115 = por %p113, %p114
      %s117 = sadd.s32 %s116, 1
      %p120 = scmp.eq.s32.totalorder %s17, 1
      %p121 = scmp.ne.s32.totalorder %s116, %s118
      %p122 = scmp.eq.s32.totalorder %s17, 0
      %p123 = por %p121, %p122
      %p124 = scmp.ne.s32.totalorder %s116, %s118
      %p125 = scmp.eq.s32.totalorder %s22, 1
      %p126 = por %p124, %p125
      %p127 = scmp.ne.s32.totalorder %s118, %s119
      %p128 = scmp.eq.s32.totalorder %s22, 0
      %p129 = por %p127, %p128
      %p130 = scmp.ne.s32.totalorder %s118, %s119
      %p131 = scmp.eq.s32.totalorder %s23, 1
      %p132 = por %p130, %p131
      %p134 = scmp.ne.s32.totalorder %s119, %s133
      %p135 = scmp.eq.s32.totalorder %s23, 0
      %p136 = por %p134, %p135
      %s138 = sadd.s32 %s137, 1
      %p141 = scmp.eq.s32.totalorder %s17, 1
      %p142 = scmp.ne.s32.totalorder %s137, %s139
      %p143 = scmp.eq.s32.totalorder %s17, 0
      %p144 = por %p142, %p143
      %p145 = scmp.ne.s32.totalorder %s137, %s139
      %p146 = scmp.eq.s32.totalorder %s22, 1
      %p147 = por %p145, %p146
      %p148 = scmp.ne.s32.totalorder %s139, %s140
      %p149 = scmp.eq.s32.totalorder %s22, 0
      %p150 = por %p148, %p149
      %p151 = scmp.ne.s32.totalorder %s139, %s140
      %p152 = scmp.eq.s32.totalorder %s23, 1
      %p153 = por %p151, %p152
      %p155 = scmp.ne.s32.totalorder %s140, %s154
      %p156 = scmp.eq.s32.totalorder %s23, 0
      %p157 = por %p155, %p156
      %s159 = sadd.s32 %s158, 1
      %p162 = scmp.eq.s32.totalorder %s17, 1
      %p163 = scmp.ne.s32.totalorder %s158, %s160
      %p164 = scmp.eq.s32.totalorder %s17, 0
      %p165 = por %p163, %p164
      %p166 = scmp.ne.s32.totalorder %s158, %s160
      %p167 = scmp.eq.s32.totalorder %s22, 1
      %p168 = por %p166, %p167
      %p169 = scmp.ne.s32.totalorder %s160, %s161
      %p170 = scmp.eq.s32.totalorder %s22, 0
      %p171 = por %p169, %p170
      %p172 = scmp.ne.s32.totalorder %s160, %s161
      %p173 = scmp.eq.s32.totalorder %s23, 1
      %p174 = por %p172, %p173
      %p176 = scmp.ne.s32.totalorder %s161, %s175
      %p177 = scmp.eq.s32.totalorder %s23, 0
      %p178 = por %p176, %p177
      %s180 = sadd.s32 %s179, 1
      %p183 = scmp.eq.s32.totalorder %s17, 1
      %p184 = scmp.ne.s32.totalorder %s179, %s181
      %p185 = scmp.eq.s32.totalorder %s17, 0
      %p186 = por %p184, %p185
      %p187 = scmp.ne.s32.totalorder %s179, %s181
      %p188 = scmp.eq.s32.totalorder %s22, 1
      %p189 = por %p187, %p188
      %p190 = scmp.ne.s32.totalorder %s181, %s182
      %p191 = scmp.eq.s32.totalorder %s22, 0
      %p192 = por %p190, %p191
      %p193 = scmp.ne.s32.totalorder %s181, %s182
      %p194 = scmp.eq.s32.totalorder %s23, 1
      %p195 = por %p193, %p194
      %p197 = scmp.ne.s32.totalorder %s182, %s196
      %p198 = scmp.eq.s32.totalorder %s23, 0
      %p199 = por %p197, %p198
      %s201 = sadd.s32 %s200, 1
      %p204 = scmp.eq.s32.totalorder %s17, 1
      %p205 = scmp.ne.s32.totalorder %s200, %s202
      %p206 = scmp.eq.s32.totalorder %s17, 0
      %p207 = por %p205, %p206
      %p208 = scmp.ne.s32.totalorder %s200, %s202
      %p209 = scmp.eq.s32.totalorder %s22, 1
      %p210 = por %p208, %p209
      %p211 = scmp.ne.s32.totalorder %s202, %s203
      %p212 = scmp.eq.s32.totalorder %s22, 0
      %p213 = por %p211, %p212
      %p214 = scmp.ne.s32.totalorder %s202, %s203
      %p215 = scmp.eq.s32.totalorder %s23, 1
      %p216 = por %p214, %p215
      %p218 = scmp.ne.s32.totalorder %s203, %s217
      %p219 = scmp.eq.s32.totalorder %s23, 0
      %p220 = por %p218, %p219
      %s221 = smul.u32 %s25, %s24
      %s222 = smul.u32 %s32, %s36
      %s223 = ssub.s32 %s221, %s222
      %p224 = scmp.eq.s32.totalorder %s223, 0
      %s226 = sadd.s32 %s225, 1
      %s227 = scalar_select %p224, %s225, %s226
      %p230 = pneg %p224
      %p231 = scmp.eq.s32.totalorder %s17, 1
      %p232 = por %p230, %p231
      %p233 = scmp.ne.s32.totalorder %s225, %s228
      %p234 = scmp.eq.s32.totalorder %s17, 0
      %p235 = por %p233, %p234
      %p236 = scmp.ne.s32.totalorder %s225, %s228
      %p237 = scmp.eq.s32.totalorder %s22, 1
      %p238 = por %p236, %p237
      %p239 = scmp.ne.s32.totalorder %s228, %s229
      %p240 = scmp.eq.s32.totalorder %s22, 0
      %p241 = por %p239, %p240
      %p242 = scmp.ne.s32.totalorder %s228, %s229
      %p243 = scmp.eq.s32.totalorder %s23, 1
      %p244 = por %p242, %p243
      %p246 = scmp.ne.s32.totalorder %s229, %s245
      %p247 = scmp.eq.s32.totalorder %s23, 0
      %p248 = por %p246, %p247
      %p249 = scmp.le.s32.totalorder 1, %s17
      %p250 = scmp.lt.s32.totalorder %s17, 3
      %p251 = pnand %p249, %p250
      %p252 = pneg %p251
      // Predicated region
      $region9: #{tpu_custom_call.1} parent=5 // pred_check
        _
      $region10: #{tpu_custom_call.1} parent=5 // pred_check_branch
        %254 = sbr.rel (%p251) target = $region12
      $region11: #{tpu_custom_call.1} parent=5 // pred_region
        %s255 = ssub.s32 %s17, 1
        // Predicated region
        $region13: #{tpu_custom_call.1} parent=11 // pred_check
          %p256 = pneg %p108
        $region14: #{tpu_custom_call.1} parent=11 // pred_check_branch
          %258 = sbr.rel (%p256) target = $region16
        $region15: #{tpu_custom_call.1} parent=11 // pred_region
          _
        $region16: #{tpu_custom_call.1} parent=11 // pred_fallthru
          _
        // Predicated region
        $region17: #{tpu_custom_call.1} parent=11 // pred_check
          %p259 = pneg %p129
        $region18: #{tpu_custom_call.1} parent=11 // pred_check_branch
          %261 = sbr.rel (%p259) target = $region20
        $region19: #{tpu_custom_call.1} parent=11 // pred_region
          _
        $region20: #{tpu_custom_call.1} parent=11 // pred_fallthru
          _
        // Predicated region
        $region21: #{tpu_custom_call.1} parent=11 // pred_check
          %p262 = pneg %p150
        $region22: #{tpu_custom_call.1} parent=11 // pred_check_branch
          %264 = sbr.rel (%p262) target = $region24
        $region23: #{tpu_custom_call.1} parent=11 // pred_region
          _
        $region24: #{tpu_custom_call.1} parent=11 // pred_fallthru
          _
        // Predicated region
        $region25: #{tpu_custom_call.1} parent=11 // pred_check
          %p265 = pneg %p171
        $region26: #{tpu_custom_call.1} parent=11 // pred_check_branch
          %267 = sbr.rel (%p265) target = $region28
        $region27: #{tpu_custom_call.1} parent=11 // pred_region
          _
        $region28: #{tpu_custom_call.1} parent=11 // pred_fallthru
          _
        // Predicated region
        $region29: #{tpu_custom_call.1} parent=11 // pred_check
          %p268 = pneg %p192
        $region30: #{tpu_custom_call.1} parent=11 // pred_check_branch
          %270 = sbr.rel (%p268) target = $region32
        $region31: #{tpu_custom_call.1} parent=11 // pred_region
          _
        $region32: #{tpu_custom_call.1} parent=11 // pred_fallthru
          _
        // Predicated region
        $region33: #{tpu_custom_call.1} parent=11 // pred_check
          %p271 = pneg %p213
        $region34: #{tpu_custom_call.1} parent=11 // pred_check_branch
          %273 = sbr.rel (%p271) target = $region36
        $region35: #{tpu_custom_call.1} parent=11 // pred_region
          _
        $region36: #{tpu_custom_call.1} parent=11 // pred_fallthru
          _
      $region12: #{tpu_custom_call.1} parent=5 // pred_fallthru
        _
      %p274 = scmp.lt.s32.totalorder %s17, 2
      // Predicated region
      $region37: #{tpu_custom_call.1} parent=5 // pred_check
        %p275 = pneg %p274
      $region38: #{tpu_custom_call.1} parent=5 // pred_check_branch
        %277 = sbr.rel (%p275) target = $region40
      $region39: #{tpu_custom_call.1} parent=5 // pred_region
        // Predicated region
        $region41: #{tpu_custom_call.1} parent=39 // pred_check
          %p278 = pneg %p53
        $region42: #{tpu_custom_call.1} parent=39 // pred_check_branch
          %280 = sbr.rel (%p278) target = $region44
        $region43: #{tpu_custom_call.1} parent=39 // pred_region
          %s281 = ssub.s32 1, %s24
          %s282 = smul.u32 %s25, %s281
          %p283 = scmp.lt.s32.totalorder %s282, 0
          %s284 = scalar_select %p283, %s282, 0
          %s285 = smul.addr %s284, 8
          %s286 = scalar_lea.vmem %s0, %s285
          %s287 = ssub.s32 1, %s24
          %s288 = smul.u32 %s25, %s287
        $region44: #{tpu_custom_call.1} parent=39 // pred_fallthru
          _
        // Predicated region
        $region45: #{tpu_custom_call.1} parent=39 // pred_check
          %p289 = pneg %p81
        $region46: #{tpu_custom_call.1} parent=39 // pred_check_branch
          %291 = sbr.rel (%p289) target = $region48
        $region47: #{tpu_custom_call.1} parent=39 // pred_region
          %s292 = smul.u32 %s25, %s24
          %p293 = scmp.lt.s32.totalorder %s292, 0
          %s294 = scalar_select %p293, %s292, 0
          %s295 = smul.addr %s294, 8
          %s296 = scalar_lea.vmem %s1, %s295
          %s297 = smul.u32 %s25, %s24
        $region48: #{tpu_custom_call.1} parent=39 // pred_fallthru
          _
      $region40: #{tpu_custom_call.1} parent=5 // pred_fallthru
        _
      %p298 = scmp.le.s32.totalorder 1, %s17
      %p299 = scmp.lt.s32.totalorder %s17, 3
      %p300 = pnand %p298, %p299
      %p301 = pneg %p300
      // Predicated region
      $region49: #{tpu_custom_call.1} parent=5 // pred_check
        _
      $region50: #{tpu_custom_call.1} parent=5 // pred_check_branch
        %303 = sbr.rel (%p300) target = $region52
      $region51: #{tpu_custom_call.1} parent=5 // pred_region
        %s304 = ssub.s32 %s17, 1
        %s305 = ssub.s32 1, %s26
        %s306 = smul.u32 %s27, %s305
        %p307 = scmp.lt.s32.totalorder %s306, 0
        %s308 = scalar_select %p307, %s306, 0
        %s309 = smul.addr %s308, 8
        %s310 = scalar_lea.vmem %s0, %s309
        %p311 = pneg %p59
        %p312 = pneg %p56
        %s313 = smul.u32 %s27, %s26
        %p314 = scmp.lt.s32.totalorder %s313, 0
        %s315 = scalar_select %p314, %s313, 0
        %s316 = smul.addr %s315, 8
        %s317 = scalar_lea.vmem %s1, %s316
        %p318 = pneg %p87
        %p319 = pneg %p84
        %p320 = pneg %p108
        %p321 = pneg %p105
        %p322 = pneg %p129
        %p323 = pneg %p126
        %p324 = pneg %p150
        %p325 = pneg %p147
        %p326 = pneg %p171
        %p327 = pneg %p168
        %p328 = pneg %p192
        %p329 = pneg %p189
        %p330 = pneg %p213
        %p331 = pneg %p210
        %p332 = pneg %p241
        %p333 = pneg %p238
        %s334 = sand.u32 %s228, 1
        %s335 = scalar_lea.sflag [#allocation7], %s334
        %s336 = sand.u32 %s228, 1
        %s337 = smul.addr %s336, 8
        %s338 = scalar_lea.vmem [#allocation6], %s337
        %s339 = ssub.s32 1, %s26
        %s340 = smul.u32 %s27, %s339
        %p341 = scmp.lt.s32.totalorder %s340, 0
        %s342 = scalar_select %p341, %s340, 0
        %s343 = smul.addr %s342, 8
        %s344 = scalar_lea.vmem %s0, %s343
        %s345 = ssub.s32 1, %s26
        %s346 = smul.u32 %s27, %s345
        %s347 = smul.u32 %s27, %s26
        %p348 = scmp.lt.s32.totalorder %s347, 0
        %s349 = scalar_select %p348, %s347, 0
        %s350 = smul.addr %s349, 8
        %s351 = scalar_lea.vmem %s1, %s350
        %s352 = smul.u32 %s27, %s26
        %s353 = smul.u32 %s27, %s26
        %s354 = smul.u32 %s27, 8
        %p355 = scmp.eq.s32.totalorder %s26, 0
        // Predicated region
        $region53: #{tpu_custom_call.1} parent=51 // pred_check
          %p356 = pneg %p355
        $region54: #{tpu_custom_call.1} parent=51 // pred_check_branch
          %358 = sbr.rel (%p356) target = $region56
        $region55: #{tpu_custom_call.1} parent=51 // pred_region
          %v359 = vld [vmem:[%s344] sm:$0xff]
          %v360 = vld [vmem:[%s2] sm:$0xff]
          %v361 = vld [vmem:[%s2 + $0x8] sm:$0xff]
          %vm362 = vcmask 130048
          %v364 = vsel %vm362, %v359, 0
          %366 = vmatprep.subr.mxu0 0.0
          %367 = vmatpush1.msra.mxu0 0.0
          %368 = vmatprep.subr.mxu0 0.0
          %369 = vmatpush1.msra.mxu0 0.0
          %370 = vmatprep.subr.mxu0 0.0
          %371 = vmatpush1.msra.mxu0 0.0
          %372 = vmatprep.subr.mxu0 0.0
          %373 = vmatpush1.msra.mxu0 0.0
          %374 = vmatprep.subr.mxu0 0.0
          %375 = vmatpush1.msra.mxu0 0.0
          %376 = vmatprep.subr.mxu0 0.0
          %377 = vmatpush1.msra.mxu0 0.0
          %378 = vmatprep.subr.mxu0 0.0
          %379 = vmatpush1.msra.mxu0 0.0
          %380 = vmatprep.subr.mxu0 0.0
          %381 = vmatpush1.msra.mxu0 0.0
          %382 = vmatprep.subr.mxu0 0.0
          %383 = vmatpush1.msra.mxu0 0.0
          %384 = vmatprep.subr.mxu0 0.0
          %385 = vmatpush1.msra.mxu0 0.0
          %386 = vmatprep.subr.mxu0 0.0
          %387 = vmatpush1.msra.mxu0 0.0
          %388 = vmatprep.subr.mxu0 0.0
          %389 = vmatpush1.msra.mxu0 0.0
          %390 = vmatprep.subr.mxu0 0.0
          %391 = vmatpush1.msra.mxu0 0.0
          %392 = vmatprep.subr.mxu0 0.0
          %393 = vmatpush1.msra.mxu0 0.0
          %394 = vmatprep.subr.mxu0 0.0
          %395 = vmatpush1.msra.mxu0 %v361
          %396 = vmatprep.subr.mxu0 0.0
          %397 = vmatpush1.msra.mxu0 %v360
          %398 = vmatprep.subr.mxu0 0.0
          %399 = vmatpush2.msra.mxu0 0.0
          %400 = vmatprep.subr.mxu0 0.0
          %401 = vmatpush2.msra.mxu0 0.0
          %402 = vmatprep.subr.mxu0 0.0
          %403 = vmatpush2.msra.mxu0 0.0
          %404 = vmatprep.subr.mxu0 0.0
          %405 = vmatpush2.msra.mxu0 0.0
          %406 = vmatprep.subr.mxu0 0.0
          %407 = vmatpush2.msra.mxu0 0.0
          %408 = vmatprep.subr.mxu0 0.0
          %409 = vmatpush2.msra.mxu0 0.0
          %410 = vmatprep.subr.mxu0 0.0
          %411 = vmatpush2.msra.mxu0 0.0
          %412 = vmatprep.subr.mxu0 0.0
          %413 = vmatpush2.msra.mxu0 0.0
          %414 = vmatprep.subr.mxu0 0.0
          %415 = vmatpush2.msra.mxu0 0.0
          %416 = vmatprep.subr.mxu0 0.0
          %417 = vmatpush2.msra.mxu0 0.0
          %418 = vmatprep.subr.mxu0 0.0
          %419 = vmatpush2.msra.mxu0 0.0
          %420 = vmatprep.subr.mxu0 0.0
          %421 = vmatpush2.msra.mxu0 0.0
          %422 = vmatprep.subr.mxu0 0.0
          %423 = vmatpush2.msra.mxu0 0.0
          %424 = vmatprep.subr.mxu0 0.0
          %425 = vmatpush2.msra.mxu0 0.0
          %426 = vmatprep.subr.mxu0 0.0
          %427 = vmatpush2.msra.mxu0 0.0
          %428 = vmatprep.subr.mxu0 0.0
          %429 = vmatpush2.msra.mxu0 0.0
          %430 = vmatprep.mubr.f32.mxu0 0.0
          %431 = vmatmul.mubr.f32.gmra.mxu0 %v364
          %v432 = vpop.f32.mrf.mxu0
          %v433 = vadd.f32 0.0, %v432
          %v434 = vpop.f32.mrf.mxu0
          %435 = vdwg.mxu0
          %s436 = scalar_lea.vmem [#allocation2], %s354
          %vm437 = vcmask 261120
          %438 = vst.msk [vmem:[%s436] sm:$0xff] %vm437, %v433
          %p439 = scmp.eq.s32.totalorder %s27, 0
          // Predicated region
          $region57: #{tpu_custom_call.1} parent=55 // pred_check
            %p440 = pneg %p439
          $region58: #{tpu_custom_call.1} parent=55 // pred_check_branch
            %442 = sbr.rel (%p440) target = $region60
          $region59: #{tpu_custom_call.1} parent=55 // pred_region
            %v443 = vsel %vm437, %v433, 0.0
            %v444 = vrot.slane %v443, 4
            %v445 = vadd.f32 %v443, %v444
            %v446 = vrot.slane %v445, 2
            %v447 = vadd.f32 %v445, %v446
            %v448 = vrot.slane %v447, 1
            %v449 = vadd.f32 %v447, %v448
            %v450 = vrcp.pop 8.0
            %v451 = vmul.f32 %v449, %v450
            %vm452 = vcmask 253952
            %453 = vst.msk [vmem:[#allocation3] sm:$0x1] %vm452, %v451
            %454 = vst.msk [vmem:[#allocation4] sm:$0x1] %vm452, 0.0
            %455 = vst.msk [vmem:[#allocation5] sm:$0x1] %vm452, 0.0
          $region60: #{tpu_custom_call.1} parent=55 // pred_fallthru
            _
          %v456 = vld [vmem:[#allocation3] sm:$0x1]
          %v458 = vlaneseq
          %v459 = vshrl.u32 %v458, 7
          %v460 = vsub.s32 0, %v459
          %v461 = vrot.slane %v456, %v460
          %v463 = vsub.f32 %v433, %v461
          %v464 = vld [vmem:[#allocation4] sm:$0x1]
          %v465 = vsel %vm437, %v463, 0.0
          %v466 = vrot.slane %v465, 4
          %v467 = vadd.f32 %v465, %v466
          %v468 = vrot.slane %v467, 2
          %v469 = vadd.f32 %v467, %v468
          %v470 = vrot.slane %v469, 1
          %v471 = vadd.f32 %v469, %v470
          %v472 = vadd.f32 %v464, %v471
          %vm473 = vcmask 253952
          %474 = vst.msk [vmem:[#allocation4] sm:$0x1] %vm473, %v472
          %v475 = vld [vmem:[#allocation5] sm:$0x1]
          %v476 = vmul.f32 %v463, %v463
          %v477 = vsel %vm437, %v476, 0.0
          %v478 = vrot.slane %v477, 4
          %v479 = vadd.f32 %v477, %v478
          %v480 = vrot.slane %v479, 2
          %v481 = vadd.f32 %v479, %v480
          %v482 = vrot.slane %v481, 1
          %v483 = vadd.f32 %v481, %v482
          %v484 = vadd.f32 %v475, %v483
          %485 = vst.msk [vmem:[#allocation5] sm:$0x1] %vm473, %v484
        $region56: #{tpu_custom_call.1} parent=51 // pred_fallthru
          _
        %p486 = scmp.eq.s32.totalorder %s26, 1
        // Predicated region
        $region61: #{tpu_custom_call.1} parent=51 // pred_check
          %p487 = pneg %p486
        $region62: #{tpu_custom_call.1} parent=51 // pred_check_branch
          %489 = sbr.rel (%p487) target = $region64
        $region63: #{tpu_custom_call.1} parent=51 // pred_region
          %v490 = vld [vmem:[#allocation4] sm:$0x1]
          %v491 = vmul.f32 %v490, 0.125
          %v492 = vld [vmem:[#allocation3] sm:$0x1]
          %v493 = vadd.f32 %v492, %v491
          %v494 = vld [vmem:[#allocation5] sm:$0x1]
          %v495 = vmul.f32 %v494, 0.125
          %v496 = vmul.f32 %v491, %v491
          %v497 = vsub.f32 %v495, %v496
          %v498 = vmax.f32 %v497, 0.0
          %v499 = vld [vmem:[%s3] sm:$0x1]
          %v500 = vadd.f32 %v498, 1e-05
          %v501 = vrsqrt.pop %v500
          %v502 = vmul.f32 %v499, %v501
          %v503 = vld [vmem:[%s4] sm:$0x1]
          %v504 = vmul.f32 %v493, %v502
          %v505 = vsub.f32 %v503, %v504
          %s506 = scalar_lea.vmem [#allocation2], %s354
          %v507 = vld [vmem:[%s506] sm:$0xff]
          %v509 = vlaneseq
          %v510 = vshrl.u32 %v509, 7
          %v511 = vsub.s32 0, %v510
          %v512 = vrot.slane %v502, %v511
          %v514 = vmul.f32 %v507, %v512
          %v516 = vlaneseq
          %v517 = vshrl.u32 %v516, 7
          %v518 = vsub.s32 0, %v517
          %v519 = vrot.slane %v505, %v518
          %v521 = vadd.f32 %v514, %v519
          %v522 = vmax.f32 %v521, 0.0
          %v523 = vld [vmem:[%s5] sm:$0xff]
          %v524 = vld [vmem:[%s5 + $0x8] sm:$0xff]
          %v525 = vld [vmem:[%s5 + $0x10] sm:$0xff]
          %v526 = vld [vmem:[%s5 + $0x18] sm:$0xff]
          %v527 = vld [vmem:[%s351] sm:$0xff]
          %v528 = vld [vmem:[%s6] sm:$0xff]
          %vm529 = vcmask 64512
          %v531 = vsel %vm529, %v527, 0
          %533 = vmatprep.subr.mxu0 0.0
          %534 = vmatpush1.msra.mxu0 0.0
          %535 = vmatprep.subr.mxu0 0.0
          %536 = vmatpush1.msra.mxu0 0.0
          %537 = vmatprep.subr.mxu0 0.0
          %538 = vmatpush1.msra.mxu0 0.0
          %539 = vmatprep.subr.mxu0 0.0
          %540 = vmatpush1.msra.mxu0 0.0
          %541 = vmatprep.subr.mxu0 0.0
          %542 = vmatpush1.msra.mxu0 0.0
          %543 = vmatprep.subr.mxu0 0.0
          %544 = vmatpush1.msra.mxu0 0.0
          %545 = vmatprep.subr.mxu0 0.0
          %546 = vmatpush1.msra.mxu0 0.0
          %547 = vmatprep.subr.mxu0 0.0
          %548 = vmatpush1.msra.mxu0 0.0
          %549 = vmatprep.subr.mxu0 0.0
          %550 = vmatpush1.msra.mxu0 0.0
          %551 = vmatprep.subr.mxu0 0.0
          %552 = vmatpush1.msra.mxu0 0.0
          %553 = vmatprep.subr.mxu0 0.0
          %554 = vmatpush1.msra.mxu0 0.0
          %555 = vmatprep.subr.mxu0 0.0
          %556 = vmatpush1.msra.mxu0 0.0
          %557 = vmatprep.subr.mxu0 0.0
          %558 = vmatpush1.msra.mxu0 0.0
          %559 = vmatprep.subr.mxu0 0.0
          %560 = vmatpush1.msra.mxu0 0.0
          %561 = vmatprep.subr.mxu0 0.0
          %562 = vmatpush1.msra.mxu0 0.0
          %563 = vmatprep.subr.mxu0 0.0
          %564 = vmatpush1.msra.mxu0 %v528
          %565 = vmatprep.subr.mxu0 0.0
          %566 = vmatpush2.msra.mxu0 0.0
          %567 = vmatprep.subr.mxu0 0.0
          %568 = vmatpush2.msra.mxu0 0.0
          %569 = vmatprep.subr.mxu0 0.0
          %570 = vmatpush2.msra.mxu0 0.0
          %571 = vmatprep.subr.mxu0 0.0
          %572 = vmatpush2.msra.mxu0 0.0
          %573 = vmatprep.subr.mxu0 0.0
          %574 = vmatpush2.msra.mxu0 0.0
          %575 = vmatprep.subr.mxu0 0.0
          %576 = vmatpush2.msra.mxu0 0.0
          %577 = vmatprep.subr.mxu0 0.0
          %578 = vmatpush2.msra.mxu0 0.0
          %579 = vmatprep.subr.mxu0 0.0
          %580 = vmatpush2.msra.mxu0 0.0
          %581 = vmatprep.subr.mxu0 0.0
          %582 = vmatpush2.msra.mxu0 0.0
          %583 = vmatprep.subr.mxu0 0.0
          %584 = vmatpush2.msra.mxu0 0.0
          %585 = vmatprep.subr.mxu0 0.0
          %586 = vmatpush2.msra.mxu0 0.0
          %587 = vmatprep.subr.mxu0 0.0
          %588 = vmatpush2.msra.mxu0 0.0
          %589 = vmatprep.subr.mxu0 0.0
          %590 = vmatpush2.msra.mxu0 0.0
          %591 = vmatprep.subr.mxu0 0.0
          %592 = vmatpush2.msra.mxu0 0.0
          %593 = vmatprep.subr.mxu0 0.0
          %594 = vmatpush2.msra.mxu0 0.0
          %595 = vmatprep.subr.mxu0 0.0
          %596 = vmatpush2.msra.mxu0 0.0
          %597 = vmatprep.mubr.f32.mxu0 0.0
          %598 = vmatmul.mubr.f32.gmra.mxu0 %v531
          %v599 = vpop.f32.mrf.mxu0
          %v600 = vadd.f32 0.0, %v599
          %v601 = vpop.f32.mrf.mxu0
          %602 = vdwg.mxu0
          %vm603 = vcmask 261120
          %v605 = vsel %vm603, %v522, 0
          %607 = vmatprep.subr.mxu0 0.0
          %608 = vmatpush1.msra.mxu0 0.0
          %609 = vmatprep.subr.mxu0 0.0
          %610 = vmatpush1.msra.mxu0 0.0
          %611 = vmatprep.subr.mxu0 0.0
          %612 = vmatpush1.msra.mxu0 0.0
          %613 = vmatprep.subr.mxu0 0.0
          %614 = vmatpush1.msra.mxu0 0.0
          %615 = vmatprep.subr.mxu0 0.0
          %616 = vmatpush1.msra.mxu0 0.0
          %617 = vmatprep.subr.mxu0 0.0
          %618 = vmatpush1.msra.mxu0 0.0
          %619 = vmatprep.subr.mxu0 0.0
          %620 = vmatpush1.msra.mxu0 0.0
          %621 = vmatprep.subr.mxu0 0.0
          %622 = vmatpush1.msra.mxu0 0.0
          %623 = vmatprep.subr.mxu0 0.0
          %624 = vmatpush1.msra.mxu0 0.0
          %625 = vmatprep.subr.mxu0 0.0
          %626 = vmatpush1.msra.mxu0 0.0
          %627 = vmatprep.subr.mxu0 0.0
          %628 = vmatpush1.msra.mxu0 0.0
          %629 = vmatprep.subr.mxu0 0.0
          %630 = vmatpush1.msra.mxu0 0.0
          %631 = vmatprep.subr.mxu0 0.0
          %632 = vmatpush1.msra.mxu0 %v526
          %633 = vmatprep.subr.mxu0 0.0
          %634 = vmatpush1.msra.mxu0 %v525
          %635 = vmatprep.subr.mxu0 0.0
          %636 = vmatpush1.msra.mxu0 %v524
          %637 = vmatprep.subr.mxu0 0.0
          %638 = vmatpush1.msra.mxu0 %v523
          %639 = vmatprep.subr.mxu0 0.0
          %640 = vmatpush2.msra.mxu0 0.0
          %641 = vmatprep.subr.mxu0 0.0
          %642 = vmatpush2.msra.mxu0 0.0
          %643 = vmatprep.subr.mxu0 0.0
          %644 = vmatpush2.msra.mxu0 0.0
          %645 = vmatprep.subr.mxu0 0.0
          %646 = vmatpush2.msra.mxu0 0.0
          %647 = vmatprep.subr.mxu0 0.0
          %648 = vmatpush2.msra.mxu0 0.0
          %649 = vmatprep.subr.mxu0 0.0
          %650 = vmatpush2.msra.mxu0 0.0
          %651 = vmatprep.subr.mxu0 0.0
          %652 = vmatpush2.msra.mxu0 0.0
          %653 = vmatprep.subr.mxu0 0.0
          %654 = vmatpush2.msra.mxu0 0.0
          %655 = vmatprep.subr.mxu0 0.0
          %656 = vmatpush2.msra.mxu0 0.0
          %657 = vmatprep.subr.mxu0 0.0
          %658 = vmatpush2.msra.mxu0 0.0
          %659 = vmatprep.subr.mxu0 0.0
          %660 = vmatpush2.msra.mxu0 0.0
          %661 = vmatprep.subr.mxu0 0.0
          %662 = vmatpush2.msra.mxu0 0.0
          %663 = vmatprep.subr.mxu0 0.0
          %664 = vmatpush2.msra.mxu0 0.0
          %665 = vmatprep.subr.mxu0 0.0
          %666 = vmatpush2.msra.mxu0 0.0
          %667 = vmatprep.subr.mxu0 0.0
          %668 = vmatpush2.msra.mxu0 0.0
          %669 = vmatprep.subr.mxu0 0.0
          %670 = vmatpush2.msra.mxu0 0.0
          %671 = vmatprep.mubr.f32.mxu0 0.0
          %672 = vmatmul.mubr.f32.gmra.mxu0 %v605
          %v673 = vpop.f32.mrf.mxu0
          %v674 = vadd.f32 %v600, %v673
          %v675 = vpop.f32.mrf.mxu0
          %676 = vdwg.mxu0
          %v677 = vld [vmem:[%s7] sm:$0x1]
          %v679 = vlaneseq
          %v680 = vshrl.u32 %v679, 7
          %v681 = vsub.s32 0, %v680
          %v682 = vrot.slane %v677, %v681
          %v684 = vadd.f32 %v674, %v682
          %vm685 = vcmask 130048
          %686 = vst.msk [vmem:[%s338] sm:$0xff] %vm685, %v684
        $region64: #{tpu_custom_call.1} parent=51 // pred_fallthru
          _
        %s687 = sand.u32 %s228, 1
        %s688 = scalar_lea.sflag [#allocation7], %s687
        %s689 = sand.u32 %s228, 1
        %s690 = smul.addr %s689, 8
        %s691 = scalar_lea.vmem [#allocation6], %s690
        // Predicated region
        $region65: #{tpu_custom_call.1} parent=51 // pred_check
          %p692 = pneg %p238
        $region66: #{tpu_custom_call.1} parent=51 // pred_check_branch
          %694 = sbr.rel (%p692) target = $region68
        $region67: #{tpu_custom_call.1} parent=51 // pred_region
          %s695 = smul.u32 %s27, %s26
          %s697 = ssub.s32 128, 128
          %698 = vsyncadd %s688, %s697
          %s699 = smul.addr %s695, 128
          %s700 = scalar_lea.hbm %s8, %s699
          %s702 = sshll.u32 %s691, 4
          %s703 = int_to_ptr.vmem [resolvable:$true] %s702
          %705 = dma.vmem_to_hbm [thread:$0]  %s703, 128, %s700, %s688
        $region68: #{tpu_custom_call.1} parent=51 // pred_fallthru
          _
      $region52: #{tpu_custom_call.1} parent=5 // pred_fallthru
        _
      %p706 = scmp.le.s32.totalorder 2, %s17
      // Predicated region
      $region69: #{tpu_custom_call.1} parent=5 // pred_check
        %p707 = pneg %p706
      $region70: #{tpu_custom_call.1} parent=5 // pred_check_branch
        %709 = sbr.rel (%p707) target = $region72
      $region71: #{tpu_custom_call.1} parent=5 // pred_region
        %s710 = ssub.s32 %s17, 2
        // Predicated region
        $region73: #{tpu_custom_call.1} parent=71 // pred_check
          %p711 = pneg %p244
        $region74: #{tpu_custom_call.1} parent=71 // pred_check_branch
          %713 = sbr.rel (%p711) target = $region76
        $region75: #{tpu_custom_call.1} parent=71 // pred_region
          %s714 = sand.u32 %s229, 1
          %s715 = scalar_lea.sflag [#allocation7], %s714
          %s716 = sand.u32 %s229, 1
          %s717 = smul.addr %s716, 8
          %s718 = scalar_lea.vmem [#allocation6], %s717
          %719 = dma.done %s715, 128
        $region76: #{tpu_custom_call.1} parent=71 // pred_fallthru
          _
      $region72: #{tpu_custom_call.1} parent=5 // pred_fallthru
        _
    $region6: #{tpu_custom_call.1} parent=1 // loop_footer
      %s21 = sadd.s32 1, %s17
    $region7: #{tpu_custom_call.1} parent=1 // loop_footer_branch
      %16 = sbr.rel target = $region3
    $region8: #{tpu_custom_call.1} parent=1 // loop_exit
      _
    %720 = vsyncpa [#allocation7], 1
    %s721 = scalar_lea.sflag [#allocation7], 1
    %722 = vsyncpa %s721, 1

</llo_original>
